<compile_context>
chip_gen: v5e
topology: v5e:2x2
jax: 0.10.0
libtpu: 0.0.40
codegen_flags: <defaults>
</compile_context>

<pallas_src>
import jax
import jax.numpy as jnp
from jax.experimental import pallas as pl
from jax.experimental.pallas import tpu as pltpu

EPS = 1e-5  # PyTorch BatchNorm1d default


def _round_up(x, m):
    return ((x + m - 1) // m) * m


# ---------------------------------------------------------------------------
# One-time feature / hardware probes (not inside any jit trace of the kernel).
# ---------------------------------------------------------------------------
def _supports_single_buffering():
    """Check whether this jax accepts pl.BlockSpec(..., pipeline_mode=pl.Buffered(1))."""
    if not hasattr(pl, "Buffered"):
        return False
    try:
        pl.BlockSpec((8, 128), lambda i: (0, 0), pipeline_mode=pl.Buffered(1))
        return True
    except Exception:
        return False


_SINGLE_BUFFER_WEIGHTS = _supports_single_buffering()


def _vmem_capacity_bytes():
    """Per-TensorCore VMEM capacity; conservative 64 MiB (v7x) if the query fails."""
    try:
        info = pltpu.get_tpu_info()
        cap = getattr(info, "vmem_capacity_bytes", None)
        if cap:
            return int(cap)
    except Exception:
        pass
    return 64 << 20


# ---------------------------------------------------------------------------
# Kernel: relu(x@w1+b1) -> relu(.@w2'+b2') -> relu(.@w3'+b3')   (BN pre-folded)
# ---------------------------------------------------------------------------
def _mlp_kernel(x_ref, w1_ref, b1_ref, w2_ref, b2_ref, w3_ref, b3_ref, o_ref):
    # Linear 1 + ReLU (BN1 folded into w2'/b2'; dropout is identity in eval mode).
    h = jnp.dot(x_ref[...], w1_ref[...], preferred_element_type=jnp.float32) + b1_ref[...]
    h = jnp.maximum(h, 0.0).astype(jnp.bfloat16)

    # Linear 2 (BN1-folded) + ReLU (BN2 folded into w3'/b3').
    h = jnp.dot(h, w2_ref[...], preferred_element_type=jnp.float32) + b2_ref[...]
    h = jnp.maximum(h, 0.0).astype(jnp.bfloat16)

    # Linear 3 (BN2-folded, lane-padded) + ReLU.
    out = jnp.dot(h, w3_ref[...], preferred_element_type=jnp.float32) + b3_ref[...]
    o_ref[...] = jnp.maximum(out, 0.0).astype(o_ref.dtype)


# ---------------------------------------------------------------------------
# Wrapper-side parameter preparation (fold BN in f32, lane-pad, cast to bf16).
# ---------------------------------------------------------------------------
def _fold_bn_into_next_linear(w, b, gamma, beta, mean, var):
    """z = BN_eval(a) @ w + b  ==  a @ (s[:,None]*w) + (t @ w + b)."""
    s = gamma * jax.lax.rsqrt(var + EPS)        # (1, F_in)
    t = beta - mean * s                         # (1, F_in)
    return w * s.reshape(-1, 1), b + t @ w


def _prepare_params(params):
    """Fold eval-mode BatchNorms into the following linears (in f32), pad every feature
    dim up to a lane-dense multiple of 128, cast weights to bf16 (biases stay f32)."""
    w1, b1 = params["w1"], params["b1"]
    w2, b2 = _fold_bn_into_next_linear(params["w2"], params["b2"],
                                       params["gamma1"], params["beta1"],
                                       params["mean1"], params["var1"])
    w3, b3 = _fold_bn_into_next_linear(params["w3"], params["b3"],
                                       params["gamma2"], params["beta2"],
                                       params["mean2"], params["var2"])
    Din, H = w1.shape
    H2 = w2.shape[1]
    C = w3.shape[1]

    Dp = _round_up(max(Din, 128), 128)
    Hp = _round_up(max(H, 128), 128)
    H2p = _round_up(max(H2, 128), 128)
    Cp = _round_up(max(C, 128), 128)

    # Zero padding is exact: padded x columns are 0, padded biases are 0, so padded
    # hidden columns are relu(0)=0 and feed zero rows of the next weight.
    w1 = jnp.pad(w1, ((0, Dp - Din), (0, Hp - H)))
    b1 = jnp.pad(b1, ((0, 0), (0, Hp - H)))
    w2 = jnp.pad(w2, ((0, Hp - H), (0, H2p - H2)))
    b2 = jnp.pad(b2, ((0, 0), (0, H2p - H2)))
    w3 = jnp.pad(w3, ((0, H2p - H2), (0, Cp - C)))
    b3 = jnp.pad(b3, ((0, 0), (0, Cp - C)))

    return dict(w1=w1.astype(jnp.bfloat16), b1=b1.astype(jnp.float32),
                w2=w2.astype(jnp.bfloat16), b2=b2.astype(jnp.float32),
                w3=w3.astype(jnp.bfloat16), b3=b3.astype(jnp.float32),
                num_classes=C, din=Din)


def _choose_batch(B):
    """Return (padded_B, batch_tile).  Never split below 128 rows; small batches run as
    one grid step (whole batch fills one MXU pass); big batches use tb=256/128."""
    Bp = _round_up(B, 8)
    if Bp < 256:
        return Bp, Bp                      # grid = 1
    Bp = _round_up(B, 128)
    if Bp % 256 == 0:
        return Bp, 256
    return Bp, 128


def fully_connected_big(x, params, *, batch_tile=None):
    """Inference forward of FullyConnectedBig. x: (B, input_size) float32."""
    p = _prepare_params(params)
    w1, b1, w2, b2, w3, b3 = p["w1"], p["b1"], p["w2"], p["b2"], p["w3"], p["b3"]
    C, Din = p["num_classes"], p["din"]

    B, Din_in = x.shape
    assert Din_in == Din, "input feature size mismatch"
    Dp, Hp = w1.shape
    H2p, Cp = w3.shape

    if batch_tile is None:
        Bp, tb = _choose_batch(B)
    else:
        tb = int(batch_tile)
        assert tb % 8 == 0, "batch tile must be a multiple of 8"
        Bp = _round_up(B, tb)
    grid = (Bp // tb,)

    # Input prep: bf16 + zero-pad batch / feature dims (sliced back at the end).
    xb = x.astype(jnp.bfloat16)
    if Bp != B or Dp != Din:
        xb = jnp.pad(xb, ((0, Bp - B), (0, Dp - Din)))

    # VMEM budget matching the buffering actually used, clamped to ~85% of the chip's
    # per-core VMEM (64 MiB on v7x, 128 MiB on v5e/v6e).
    wmult = 1 if _SINGLE_BUFFER_WEIGHTS else 2
    weight_bytes = wmult * (w1.size + w2.size + w3.size) * 2            # bf16
    bias_bytes = wmult * (b1.size + b2.size + b3.size) * 4              # f32
    io_bytes = 2 * tb * Dp * 2 + 2 * tb * Cp * 4                        # x (bf16) / out (f32), dbl-buffered
    inter_bytes = tb * (Hp + H2p) * (4 + 2) + tb * Cp * 4               # f32 accum + bf16 casts
    estimate = weight_bytes + bias_bytes + io_bytes + inter_bytes + (8 << 20)
    vmem_cap = _vmem_capacity_bytes()
    vmem_limit = int(min(max(estimate, 32 << 20), int(0.85 * vmem_cap)))

    cost = pl.CostEstimate(
        flops=2 * Bp * (Dp * Hp + Hp * H2p + H2p * Cp),
        transcendentals=0,
        bytes_accessed=int(Bp * Dp * 2 + Bp * Cp * 4
                           + (w1.size + w2.size + w3.size) * 2
                           + (b1.size + b2.size + b3.size) * 4),
    )

    def const_spec(shape):
        # Same block every grid step -> fetched once; single-buffered when supported.
        if _SINGLE_BUFFER_WEIGHTS:
            return pl.BlockSpec(shape, lambda i: (0, 0), pipeline_mode=pl.Buffered(1))
        return pl.BlockSpec(shape, lambda i: (0, 0))

    # Only shard across TensorCores when there is more than one grid step.
    dim_sem = ("parallel",) if grid[0] > 1 else ("arbitrary",)

    fn = pl.pallas_call(
        _mlp_kernel,
        out_shape=jax.ShapeDtypeStruct((Bp, Cp), jnp.float32),
        grid_spec=pltpu.PrefetchScalarGridSpec(
            num_scalar_prefetch=0,
            grid=grid,
            in_specs=[
                pl.BlockSpec((tb, Dp), lambda i: (i, 0)),     # x (per-step tile, bf16)
                const_spec((Dp, Hp)), const_spec((1, Hp)),    # w1, b1
                const_spec((Hp, H2p)), const_spec((1, H2p)),  # w2' (BN1 folded), b2'
                const_spec((H2p, Cp)), const_spec((1, Cp)),   # w3' (BN2 folded), b3'
            ],
            out_specs=pl.BlockSpec((tb, Cp), lambda i: (i, 0)),
        ),
        compiler_params=pltpu.CompilerParams(
            dimension_semantics=dim_sem,
            vmem_limit_bytes=vmem_limit),
        cost_estimate=cost,
    )
    out = fn(xb, w1, b1, w2, b2, w3, b3)
    return out[:B, :C]


# ---------------------------------------------------------------------------
# Deterministic parameter init (mirrors nn.Linear U(-1/sqrt(fan_in), 1/sqrt(fan_in))
# plus non-trivial BatchNorm affine / running stats) and a pure-JAX f32 reference.
# ---------------------------------------------------------------------------
def init_params(key, input_size, hidden_size, num_classes):
    h2 = hidden_size // 2
    ks = jax.random.split(key, 12)

    def lin(kw, kb, fan_in, fan_out):
        bound = 1.0 / jnp.sqrt(fan_in)
        w = jax.random.uniform(kw, (fan_in, fan_out), jnp.float32, -bound, bound)
        b = jax.random.uniform(kb, (1, fan_out), jnp.float32, -bound, bound)
        return w, b

    w1, b1 = lin(ks[0], ks[1], input_size, hidden_size)
    w2, b2 = lin(ks[2], ks[3], hidden_size, h2)
    w3, b3 = lin(ks[4], ks[5], h2, num_classes)

    def bn(kg, kb, km, n):
        gamma = 1.0 + 0.1 * jax.random.normal(kg, (1, n), jnp.float32)
        beta = 0.1 * jax.random.normal(kb, (1, n), jnp.float32)
        mean = 0.1 * jax.random.normal(km, (1, n), jnp.float32)
        var = jnp.ones((1, n), jnp.float32) * 0.9
        return gamma, beta, mean, var

    gamma1, beta1, mean1, var1 = bn(ks[6], ks[7], ks[8], hidden_size)
    gamma2, beta2, mean2, var2 = bn(ks[9], ks[10], ks[11], h2)

    return dict(w1=w1, b1=b1, gamma1=gamma1, beta1=beta1, mean1=mean1, var1=var1,
                w2=w2, b2=b2, gamma2=gamma2, beta2=beta2, mean2=mean2, var2=var2,
                w3=w3, b3=b3)


def _reference(x, p):
    h = jnp.maximum(x @ p["w1"] + p["b1"], 0.0)
    h = (h - p["mean1"]) / jnp.sqrt(p["var1"] + EPS) * p["gamma1"] + p["beta1"]
    h = jnp.maximum(h @ p["w2"] + p["b2"], 0.0)
    h = (h - p["mean2"]) / jnp.sqrt(p["var2"] + EPS) * p["gamma2"] + p["beta2"]
    return jnp.maximum(h @ p["w3"] + p["b3"], 0.0)


if __name__ == "__main__":
    # Small shapes consistent with the module (input_size == hidden_size, num_classes=1).
    B, INPUT, HIDDEN, NCLS = 32, 256, 256, 1

    key = jax.random.PRNGKey(0)
    kx, kp = jax.random.split(key)
    x = jax.random.normal(kx, (B, INPUT), jnp.float32)
    params = init_params(kp, INPUT, HIDDEN, NCLS)

    out = fully_connected_big(x, params)     # small batch -> single grid step, full MXU M fill
    out = jax.block_until_ready(out)

    ref = _reference(x, params)
    assert out.shape == (B, NCLS)
    # bf16 input/weights/activations with f32 accumulation -> loosened tolerance vs f32 reference.
    max_err = float(jnp.max(jnp.abs(out - ref)))
    assert jnp.allclose(out, ref, atol=3e-2, rtol=3e-2), f"mismatch vs reference (max err {max_err})"

    print("KERNEL_OK")
</pallas_src>

<mosaic_0001>
module attributes {stable_mosaic.version = 11 : i64} {
  func.func @_mlp_kernel(%arg0: i32, %arg1: memref<32x256xbf16, #tpu.memory_space<vmem>>, %arg2: memref<256x256xbf16, #tpu.memory_space<vmem>>, %arg3: memref<1x256xf32, #tpu.memory_space<vmem>>, %arg4: memref<256x128xbf16, #tpu.memory_space<vmem>>, %arg5: memref<1x128xf32, #tpu.memory_space<vmem>>, %arg6: memref<128x128xbf16, #tpu.memory_space<vmem>>, %arg7: memref<1x128xf32, #tpu.memory_space<vmem>>, %arg8: memref<32x128xf32, #tpu.memory_space<vmem>>) attributes {dimension_semantics = [#tpu.dimension_semantics<arbitrary>], iteration_bounds = array<i64: 1>, scalar_prefetch = 0 : i64, scratch_operands = 0 : i64, tpu.core_type = #tpu.core_type<tc>, window_params = [{transform_indices = @transform_0, window_bounds = array<i64: 32, 256>}, {pipeline_mode = #tpu.pipeline_mode<synchronous>, transform_indices = @transform_1, window_bounds = array<i64: 256, 256>}, {pipeline_mode = #tpu.pipeline_mode<synchronous>, transform_indices = @transform_2, window_bounds = array<i64: 1, 256>}, {pipeline_mode = #tpu.pipeline_mode<synchronous>, transform_indices = @transform_3, window_bounds = array<i64: 256, 128>}, {pipeline_mode = #tpu.pipeline_mode<synchronous>, transform_indices = @transform_4, window_bounds = array<i64: 1, 128>}, {pipeline_mode = #tpu.pipeline_mode<synchronous>, transform_indices = @transform_5, window_bounds = array<i64: 128, 128>}, {pipeline_mode = #tpu.pipeline_mode<synchronous>, transform_indices = @transform_6, window_bounds = array<i64: 1, 128>}, {transform_indices = @transform_7, window_bounds = array<i64: 32, 128>}]} {
    %c0 = arith.constant 0 : index
    %c0_0 = arith.constant 0 : index
    %0 = vector.load %arg1[%c0, %c0_0] : memref<32x256xbf16, #tpu.memory_space<vmem>>, vector<32x256xbf16>
    %c0_1 = arith.constant 0 : index
    %c0_2 = arith.constant 0 : index
    %1 = vector.load %arg2[%c0_1, %c0_2] : memref<256x256xbf16, #tpu.memory_space<vmem>>, vector<256x256xbf16>
    %cst = arith.constant dense<0.000000e+00> : vector<32x256xf32>
    %2 = tpu.matmul %0, %1, %cst {dimension_numbers = #tpu.dot_dimension_numbers<[1], [0], [0], [1], [0, 0, 1, 1], [], []>} : vector<32x256xbf16>, vector<256x256xbf16>, vector<32x256xf32> -> vector<32x256xf32>
    %c0_3 = arith.constant 0 : index
    %c0_4 = arith.constant 0 : index
    %3 = vector.load %arg3[%c0_3, %c0_4] : memref<1x256xf32, #tpu.memory_space<vmem>>, vector<1x256xf32>
    %4 = vector.broadcast %3 : vector<1x256xf32> to vector<32x256xf32>
    %5 = arith.addf %2, %4 : vector<32x256xf32>
    %cst_5 = arith.constant 0.000000e+00 : f32
    %6 = vector.broadcast %cst_5 : f32 to vector<32x256xf32>
    %7 = arith.maximumf %5, %6 : vector<32x256xf32>
    %8 = arith.truncf %7 : vector<32x256xf32> to vector<32x256xbf16>
    %c0_6 = arith.constant 0 : index
    %c0_7 = arith.constant 0 : index
    %9 = vector.load %arg4[%c0_6, %c0_7] : memref<256x128xbf16, #tpu.memory_space<vmem>>, vector<256x128xbf16>
    %cst_8 = arith.constant dense<0.000000e+00> : vector<32x128xf32>
    %10 = tpu.matmul %8, %9, %cst_8 {dimension_numbers = #tpu.dot_dimension_numbers<[1], [0], [0], [1], [0, 0, 1, 1], [], []>} : vector<32x256xbf16>, vector<256x128xbf16>, vector<32x128xf32> -> vector<32x128xf32>
    %c0_9 = arith.constant 0 : index
    %c0_10 = arith.constant 0 : index
    %11 = vector.load %arg5[%c0_9, %c0_10] : memref<1x128xf32, #tpu.memory_space<vmem>>, vector<1x128xf32>
    %12 = vector.broadcast %11 : vector<1x128xf32> to vector<32x128xf32>
    %13 = arith.addf %10, %12 : vector<32x128xf32>
    %cst_11 = arith.constant 0.000000e+00 : f32
    %14 = vector.broadcast %cst_11 : f32 to vector<32x128xf32>
    %15 = arith.maximumf %13, %14 : vector<32x128xf32>
    %16 = arith.truncf %15 : vector<32x128xf32> to vector<32x128xbf16>
    %c0_12 = arith.constant 0 : index
    %c0_13 = arith.constant 0 : index
    %17 = vector.load %arg6[%c0_12, %c0_13] : memref<128x128xbf16, #tpu.memory_space<vmem>>, vector<128x128xbf16>
    %cst_14 = arith.constant dense<0.000000e+00> : vector<32x128xf32>
    %18 = tpu.matmul %16, %17, %cst_14 {dimension_numbers = #tpu.dot_dimension_numbers<[1], [0], [0], [1], [0, 0, 1, 1], [], []>} : vector<32x128xbf16>, vector<128x128xbf16>, vector<32x128xf32> -> vector<32x128xf32>
    %c0_15 = arith.constant 0 : index
    %c0_16 = arith.constant 0 : index
    %19 = vector.load %arg7[%c0_15, %c0_16] : memref<1x128xf32, #tpu.memory_space<vmem>>, vector<1x128xf32>
    %20 = vector.broadcast %19 : vector<1x128xf32> to vector<32x128xf32>
    %21 = arith.addf %18, %20 : vector<32x128xf32>
    %cst_17 = arith.constant 0.000000e+00 : f32
    %22 = vector.broadcast %cst_17 : f32 to vector<32x128xf32>
    %23 = arith.maximumf %21, %22 : vector<32x128xf32>
    %c0_18 = arith.constant 0 : index
    %c0_19 = arith.constant 0 : index
    %24 = vector.load %arg8[%c0_18, %c0_19] : memref<32x128xf32, #tpu.memory_space<vmem>>, vector<32x128xf32>
    tpu.vector_store %arg8[%c0_18, %c0_19], %23 {strides = array<i32>} : memref<32x128xf32, #tpu.memory_space<vmem>>, vector<32x128xf32>,
    return
  }
  func.func @transform_0(%arg0: i32) -> (i32, i32) {
    %c0_i32 = arith.constant 0 : i32
    %c0_i32_0 = arith.constant 0 : i32
    return %arg0, %c0_i32 : i32, i32
  }
  func.func @transform_1(%arg0: i32) -> (i32, i32) {
    %c0_i32 = arith.constant 0 : i32
    %c0_i32_0 = arith.constant 0 : i32
    %c0_i32_1 = arith.constant 0 : i32
    return %c0_i32, %c0_i32_0 : i32, i32
  }
  func.func @transform_2(%arg0: i32) -> (i32, i32) {
    %c0_i32 = arith.constant 0 : i32
    %c0_i32_0 = arith.constant 0 : i32
    %c0_i32_1 = arith.constant 0 : i32
    return %c0_i32, %c0_i32_0 : i32, i32
  }
  func.func @transform_3(%arg0: i32) -> (i32, i32) {
    %c0_i32 = arith.constant 0 : i32
    %c0_i32_0 = arith.constant 0 : i32
    %c0_i32_1 = arith.constant 0 : i32
    return %c0_i32, %c0_i32_0 : i32, i32
  }
  func.func @transform_4(%arg0: i32) -> (i32, i32) {
    %c0_i32 = arith.constant 0 : i32
    %c0_i32_0 = arith.constant 0 : i32
    %c0_i32_1 = arith.constant 0 : i32
    return %c0_i32, %c0_i32_0 : i32, i32
  }
  func.func @transform_5(%arg0: i32) -> (i32, i32) {
    %c0_i32 = arith.constant 0 : i32
    %c0_i32_0 = arith.constant 0 : i32
    %c0_i32_1 = arith.constant 0 : i32
    return %c0_i32, %c0_i32_0 : i32, i32
  }
  func.func @transform_6(%arg0: i32) -> (i32, i32) {
    %c0_i32 = arith.constant 0 : i32
    %c0_i32_0 = arith.constant 0 : i32
    %c0_i32_1 = arith.constant 0 : i32
    return %c0_i32, %c0_i32_0 : i32, i32
  }
  func.func @transform_7(%arg0: i32) -> (i32, i32) {
    %c0_i32 = arith.constant 0 : i32
    %c0_i32_0 = arith.constant 0 : i32
    return %arg0, %c0_i32 : i32, i32
  }
}

</mosaic_0001>

<llo_original>
// kernel: tpu_custom_call.1
$region0: #{tpu_custom_call.1}
  #allocation0 [shape = 'u32[]', space=smem, size = 0x4, offset = 0x4, fixed_abs, tag = 'smem constant byte address 0x4 - core index']
  #allocation1 [shape = 'u32[72,128]{1,0:T(1,128)}', space=vmem, size = 0x9000, scoped, tag = 'internal scratch']
  %s0 = inlined_call_operand.hbm [shape: bf16[32,256], index: 0, kind: input, shape index: {}]
  %s1 = inlined_call_operand.hbm [shape: bf16[256,256], index: 1, kind: input, shape index: {}]
  %s2 = inlined_call_operand.hbm [shape: f32[1,256], index: 2, kind: input, shape index: {}]
  %s3 = inlined_call_operand.hbm [shape: bf16[256,128], index: 3, kind: input, shape index: {}]
  %s4 = inlined_call_operand.vmem [shape: f32[1,128], index: 4, kind: input, shape index: {}]
  %s5 = inlined_call_operand.hbm [shape: bf16[128,128], index: 5, kind: input, shape index: {}]
  %s6 = inlined_call_operand.vmem [shape: f32[1,128], index: 6, kind: input, shape index: {}]
  %s7 = inlined_call_operand.hbm [shape: f32[32,128], index: 7, kind: output, shape index: {}]
  %s8 = sld [smem:[#allocation0]]
  $region58: #{tpu_custom_call.1} parent=0
    _
  %s10 = ssub.s32 1, %s8
  %s11 = scalar_select 0, %s10, %s8
  $region1: #{tpu_custom_call.1} parent=0
    #allocation2 [shape = 'u8[16384]{0}', space=vmem, size = 0x4000, scoped, tag = 'input window, operand 0, single buffered']
    #allocation3 [shape = 's32[1]{0}', space=sflag, size = 0x4, scoped, tag = 'scoped memory for tpu_custom_call.1']
    #allocation4 [shape = 's32[1]{0}', space=sflag, size = 0x4, scoped, tag = 'scoped memory for tpu_custom_call.1']
    #allocation5 [shape = 'u8[131072]{0}', space=vmem, size = 0x20000, scoped, tag = 'input window, operand 1, single buffered']
    #allocation6 [shape = 's32[1]{0}', space=sflag, size = 0x4, scoped, tag = 'scoped memory for tpu_custom_call.1']
    #allocation7 [shape = 'u8[1024]{0}', space=vmem, size = 0x400, scoped, tag = 'input window, operand 2, single buffered']
    #allocation8 [shape = 'u8[65536]{0}', space=vmem, size = 0x10000, scoped, tag = 'input window, operand 3, single buffered']
    #allocation9 [shape = 's32[1]{0}', space=sflag, size = 0x4, scoped, tag = 'scoped memory for tpu_custom_call.1']
    #allocation10 [shape = 'u8[32768]{0}', space=vmem, size = 0x8000, scoped, tag = 'input window, operand 5, single buffered']
    #allocation11 [shape = 'u8[16384]{0}', space=vmem, size = 0x4000, scoped, tag = 'output window, operand 0, single buffered']
    %12 = vsyncpa [#allocation3], 0
    %13 = vsyncpa [#allocation6], 0
    %14 = vsyncpa [#allocation9], 0
    %15 = vsyncpa [#allocation4], 0
    // Predicated region
    $region2: #{tpu_custom_call.1} parent=1 // pred_check
      _
    $region3: #{tpu_custom_call.1} parent=1 // pred_check_branch
      %17 = sbr.rel (0) target = $region5
    $region4: #{tpu_custom_call.1} parent=1 // pred_region
      %19 = vsyncadd [#allocation3], 0
      %s20 = sshll.u32 %s0, 4
      %s21 = int_to_ptr.hbm [resolvable:$true] %s20
      %s22 = sshll.u32 [#allocation2], 4
      %s23 = int_to_ptr.vmem [resolvable:$true] %s22
      %28 = dma.hbm_to_vmem [thread:$0]  %s21, 512, %s23, [#allocation3], 128, 128, 8
    $region5: #{tpu_custom_call.1} parent=1 // pred_fallthru
      _
    // Predicated region
    $region6: #{tpu_custom_call.1} parent=1 // pred_check
      _
    $region7: #{tpu_custom_call.1} parent=1 // pred_check_branch
      %30 = sbr.rel (0) target = $region9
    $region8: #{tpu_custom_call.1} parent=1 // pred_region
      %32 = vsyncadd [#allocation6], 0
      %s33 = sshll.u32 %s1, 4
      %s34 = int_to_ptr.hbm [resolvable:$true] %s33
      %s35 = sshll.u32 [#allocation5], 4
      %s36 = int_to_ptr.vmem [resolvable:$true] %s35
      %41 = dma.hbm_to_vmem [thread:$0]  %s34, 4096, %s36, [#allocation6], 128, 128, 8
    $region9: #{tpu_custom_call.1} parent=1 // pred_fallthru
      _
    // Predicated region
    $region10: #{tpu_custom_call.1} parent=1 // pred_check
      _
    $region11: #{tpu_custom_call.1} parent=1 // pred_check_branch
      %43 = sbr.rel (0) target = $region13
    $region12: #{tpu_custom_call.1} parent=1 // pred_region
      %45 = vsyncadd [#allocation6], 0
      %s47 = sshll.u32 %s2, 4
      %s48 = int_to_ptr.hbm [resolvable:$true] %s47
      %s49 = sshll.u32 [#allocation7], 4
      %s50 = int_to_ptr.vmem [resolvable:$true] %s49
      %52 = dma.hbm_to_vmem [thread:$0]  %s48, 32, %s50, [#allocation6]
    $region13: #{tpu_custom_call.1} parent=1 // pred_fallthru
      _
    // Predicated region
    $region14: #{tpu_custom_call.1} parent=1 // pred_check
      _
    $region15: #{tpu_custom_call.1} parent=1 // pred_check_branch
      %54 = sbr.rel (0) target = $region17
    $region16: #{tpu_custom_call.1} parent=1 // pred_region
      %56 = vsyncadd [#allocation9], 0
      %s57 = sshll.u32 %s3, 4
      %s58 = int_to_ptr.hbm [resolvable:$true] %s57
      %s59 = sshll.u32 [#allocation8], 4
      %s60 = int_to_ptr.vmem [resolvable:$true] %s59
      %65 = dma.hbm_to_vmem [thread:$0]  %s58, 2048, %s60, [#allocation9], 64, 64, 4
    $region17: #{tpu_custom_call.1} parent=1 // pred_fallthru
      _
    // Predicated region
    $region18: #{tpu_custom_call.1} parent=1 // pred_check
      _
    $region19: #{tpu_custom_call.1} parent=1 // pred_check_branch
      %67 = sbr.rel (0) target = $region21
    $region20: #{tpu_custom_call.1} parent=1 // pred_region
      _
    $region21: #{tpu_custom_call.1} parent=1 // pred_fallthru
      _
    // Predicated region
    $region22: #{tpu_custom_call.1} parent=1 // pred_check
      _
    $region23: #{tpu_custom_call.1} parent=1 // pred_check_branch
      %69 = sbr.rel (0) target = $region25
    $region24: #{tpu_custom_call.1} parent=1 // pred_region
      %71 = vsyncadd [#allocation9], 0
      %s72 = sshll.u32 %s5, 4
      %s73 = int_to_ptr.hbm [resolvable:$true] %s72
      %s74 = sshll.u32 [#allocation10], 4
      %s75 = int_to_ptr.vmem [resolvable:$true] %s74
      %80 = dma.hbm_to_vmem [thread:$0]  %s73, 1024, %s75, [#allocation9], 64, 64, 4
    $region25: #{tpu_custom_call.1} parent=1 // pred_fallthru
      _
    // Predicated region
    $region26: #{tpu_custom_call.1} parent=1 // pred_check
      _
    $region27: #{tpu_custom_call.1} parent=1 // pred_check_branch
      %82 = sbr.rel (0) target = $region29
    $region28: #{tpu_custom_call.1} parent=1 // pred_region
      _
    $region29: #{tpu_custom_call.1} parent=1 // pred_fallthru
      _
    // Predicated region
    $region30: #{tpu_custom_call.1} parent=1 // pred_check
      _
    $region31: #{tpu_custom_call.1} parent=1 // pred_check_branch
      %84 = sbr.rel (0) target = $region33
    $region32: #{tpu_custom_call.1} parent=1 // pred_region
      %86 = dma.done [#allocation3], 512
    $region33: #{tpu_custom_call.1} parent=1 // pred_fallthru
      _
    // Predicated region
    $region34: #{tpu_custom_call.1} parent=1 // pred_check
      _
    $region35: #{tpu_custom_call.1} parent=1 // pred_check_branch
      %88 = sbr.rel (0) target = $region37
    $region36: #{tpu_custom_call.1} parent=1 // pred_region
      %90 = dma.done [#allocation6], 4096
    $region37: #{tpu_custom_call.1} parent=1 // pred_fallthru
      _
    // Predicated region
    $region38: #{tpu_custom_call.1} parent=1 // pred_check
      _
    $region39: #{tpu_custom_call.1} parent=1 // pred_check_branch
      %92 = sbr.rel (0) target = $region41
    $region40: #{tpu_custom_call.1} parent=1 // pred_region
      %94 = dma.done [#allocation6], 32
    $region41: #{tpu_custom_call.1} parent=1 // pred_fallthru
      _
    // Predicated region
    $region42: #{tpu_custom_call.1} parent=1 // pred_check
      _
    $region43: #{tpu_custom_call.1} parent=1 // pred_check_branch
      %96 = sbr.rel (0) target = $region45
    $region44: #{tpu_custom_call.1} parent=1 // pred_region
      %98 = dma.done [#allocation9], 2048
    $region45: #{tpu_custom_call.1} parent=1 // pred_fallthru
      _
    // Predicated region
    $region46: #{tpu_custom_call.1} parent=1 // pred_check
      _
    $region47: #{tpu_custom_call.1} parent=1 // pred_check_branch
      %100 = sbr.rel (0) target = $region49
    $region48: #{tpu_custom_call.1} parent=1 // pred_region
      %102 = dma.done [#allocation9], 1024
    $region49: #{tpu_custom_call.1} parent=1 // pred_fallthru
      _
    %v103 = vld [vmem:[#allocation2] sm:$0xff]
    %v104 = vld [vmem:[#allocation2 + $0x8] sm:$0xff]
    %v105 = vld [vmem:[#allocation2 + $0x10] sm:$0xff]
    %v106 = vld [vmem:[#allocation2 + $0x18] sm:$0xff]
    %v107 = vld [vmem:[#allocation5] sm:$0xff]
    %v108 = vld [vmem:[#allocation5 + $0x8] sm:$0xff]
    %v109 = vld [vmem:[#allocation5 + $0x10] sm:$0xff]
    %v110 = vld [vmem:[#allocation5 + $0x18] sm:$0xff]
    %v111 = vld [vmem:[#allocation5 + $0x20] sm:$0xff]
    %v112 = vld [vmem:[#allocation5 + $0x28] sm:$0xff]
    %v113 = vld [vmem:[#allocation5 + $0x30] sm:$0xff]
    %v114 = vld [vmem:[#allocation5 + $0x38] sm:$0xff]
    %v115 = vld [vmem:[#allocation5 + $0x40] sm:$0xff]
    %v116 = vld [vmem:[#allocation5 + $0x48] sm:$0xff]
    %v117 = vld [vmem:[#allocation5 + $0x50] sm:$0xff]
    %v118 = vld [vmem:[#allocation5 + $0x58] sm:$0xff]
    %v119 = vld [vmem:[#allocation5 + $0x60] sm:$0xff]
    %v120 = vld [vmem:[#allocation5 + $0x68] sm:$0xff]
    %v121 = vld [vmem:[#allocation5 + $0x70] sm:$0xff]
    %v122 = vld [vmem:[#allocation5 + $0x78] sm:$0xff]
    %v123 = vld [vmem:[#allocation5 + $0x80] sm:$0xff]
    %v124 = vld [vmem:[#allocation5 + $0x88] sm:$0xff]
    %v125 = vld [vmem:[#allocation5 + $0x90] sm:$0xff]
    %v126 = vld [vmem:[#allocation5 + $0x98] sm:$0xff]
    %v127 = vld [vmem:[#allocation5 + $0xa0] sm:$0xff]
    %v128 = vld [vmem:[#allocation5 + $0xa8] sm:$0xff]
    %v129 = vld [vmem:[#allocation5 + $0xb0] sm:$0xff]
    %v130 = vld [vmem:[#allocation5 + $0xb8] sm:$0xff]
    %v131 = vld [vmem:[#allocation5 + $0xc0] sm:$0xff]
    %v132 = vld [vmem:[#allocation5 + $0xc8] sm:$0xff]
    %v133 = vld [vmem:[#allocation5 + $0xd0] sm:$0xff]
    %v134 = vld [vmem:[#allocation5 + $0xd8] sm:$0xff]
    %v135 = vld [vmem:[#allocation5 + $0xe0] sm:$0xff]
    %v136 = vld [vmem:[#allocation5 + $0xe8] sm:$0xff]
    %v137 = vld [vmem:[#allocation5 + $0xf0] sm:$0xff]
    %v138 = vld [vmem:[#allocation5 + $0xf8] sm:$0xff]
    %v139 = vld [vmem:[#allocation7] sm:$0x3]
    %v141 = vperm.slane %v139, 0
    %v142 = vperm.slane %v139, 1
    %v149 = vunpack.c.l.b16 %v103
    %v150 = vunpack.c.h.b16 %v103
    %v151 = vunpack.c.l.b16 %v104
    %v152 = vunpack.c.h.b16 %v104
    %v153 = vunpack.c.l.b16 %v105
    %v154 = vunpack.c.h.b16 %v105
    %v155 = vunpack.c.l.b16 %v106
    %v156 = vunpack.c.h.b16 %v106
    %v157 = vpack.c.b16 %v151, %v149
    %v158 = vpack.c.b16 %v152, %v150
    %v159 = vpack.c.b16 %v155, %v153
    %v160 = vpack.c.b16 %v156, %v154
    %v197 = vunpack.c.l.b16 %v107
    %v198 = vunpack.c.h.b16 %v107
    %v199 = vunpack.c.l.b16 %v108
    %v200 = vunpack.c.h.b16 %v108
    %v201 = vunpack.c.l.b16 %v109
    %v202 = vunpack.c.h.b16 %v109
    %v203 = vunpack.c.l.b16 %v110
    %v204 = vunpack.c.h.b16 %v110
    %v205 = vunpack.c.l.b16 %v111
    %v206 = vunpack.c.h.b16 %v111
    %v207 = vunpack.c.l.b16 %v112
    %v208 = vunpack.c.h.b16 %v112
    %v209 = vunpack.c.l.b16 %v113
    %v210 = vunpack.c.h.b16 %v113
    %v211 = vunpack.c.l.b16 %v114
    %v212 = vunpack.c.h.b16 %v114
    %v213 = vunpack.c.l.b16 %v115
    %v214 = vunpack.c.h.b16 %v115
    %v215 = vunpack.c.l.b16 %v116
    %v216 = vunpack.c.h.b16 %v116
    %v217 = vunpack.c.l.b16 %v117
    %v218 = vunpack.c.h.b16 %v117
    %v219 = vunpack.c.l.b16 %v118
    %v220 = vunpack.c.h.b16 %v118
    %v221 = vunpack.c.l.b16 %v119
    %v222 = vunpack.c.h.b16 %v119
    %v223 = vunpack.c.l.b16 %v120
    %v224 = vunpack.c.h.b16 %v120
    %v225 = vunpack.c.l.b16 %v121
    %v226 = vunpack.c.h.b16 %v121
    %v227 = vunpack.c.l.b16 %v122
    %v228 = vunpack.c.h.b16 %v122
    %v229 = vunpack.c.l.b16 %v123
    %v230 = vunpack.c.h.b16 %v123
    %v231 = vunpack.c.l.b16 %v124
    %v232 = vunpack.c.h.b16 %v124
    %v233 = vunpack.c.l.b16 %v125
    %v234 = vunpack.c.h.b16 %v125
    %v235 = vunpack.c.l.b16 %v126
    %v236 = vunpack.c.h.b16 %v126
    %v237 = vunpack.c.l.b16 %v127
    %v238 = vunpack.c.h.b16 %v127
    %v239 = vunpack.c.l.b16 %v128
    %v240 = vunpack.c.h.b16 %v128
    %v241 = vunpack.c.l.b16 %v129
    %v242 = vunpack.c.h.b16 %v129
    %v243 = vunpack.c.l.b16 %v130
    %v244 = vunpack.c.h.b16 %v130
    %v245 = vunpack.c.l.b16 %v131
    %v246 = vunpack.c.h.b16 %v131
    %v247 = vunpack.c.l.b16 %v132
    %v248 = vunpack.c.h.b16 %v132
    %v249 = vunpack.c.l.b16 %v133
    %v250 = vunpack.c.h.b16 %v133
    %v251 = vunpack.c.l.b16 %v134
    %v252 = vunpack.c.h.b16 %v134
    %v253 = vunpack.c.l.b16 %v135
    %v254 = vunpack.c.h.b16 %v135
    %v255 = vunpack.c.l.b16 %v136
    %v256 = vunpack.c.h.b16 %v136
    %v257 = vunpack.c.l.b16 %v137
    %v258 = vunpack.c.h.b16 %v137
    %v259 = vunpack.c.l.b16 %v138
    %v260 = vunpack.c.h.b16 %v138
    %v261 = vpack.c.b16 %v199, %v197
    %v262 = vpack.c.b16 %v200, %v198
    %v263 = vpack.c.b16 %v203, %v201
    %v264 = vpack.c.b16 %v204, %v202
    %v265 = vpack.c.b16 %v207, %v205
    %v266 = vpack.c.b16 %v208, %v206
    %v267 = vpack.c.b16 %v211, %v209
    %v268 = vpack.c.b16 %v212, %v210
    %v269 = vpack.c.b16 %v215, %v213
    %v270 = vpack.c.b16 %v216, %v214
    %v271 = vpack.c.b16 %v219, %v217
    %v272 = vpack.c.b16 %v220, %v218
    %v273 = vpack.c.b16 %v223, %v221
    %v274 = vpack.c.b16 %v224, %v222
    %v275 = vpack.c.b16 %v227, %v225
    %v276 = vpack.c.b16 %v228, %v226
    %v277 = vpack.c.b16 %v231, %v229
    %v278 = vpack.c.b16 %v232, %v230
    %v279 = vpack.c.b16 %v235, %v233
    %v280 = vpack.c.b16 %v236, %v234
    %v281 = vpack.c.b16 %v239, %v237
    %v282 = vpack.c.b16 %v240, %v238
    %v283 = vpack.c.b16 %v243, %v241
    %v284 = vpack.c.b16 %v244, %v242
    %v285 = vpack.c.b16 %v247, %v245
    %v286 = vpack.c.b16 %v248, %v246
    %v287 = vpack.c.b16 %v251, %v249
    %v288 = vpack.c.b16 %v252, %v250
    %v289 = vpack.c.b16 %v255, %v253
    %v290 = vpack.c.b16 %v256, %v254
    %v291 = vpack.c.b16 %v259, %v257
    %v292 = vpack.c.b16 %v260, %v258
    %325 = vmatpush.bf16.msra.mxu0 %v275
    %326 = vmatpush.bf16.msra.mxu0 %v273
    %327 = vmatpush.bf16.msra.mxu0 %v271
    %328 = vmatpush.bf16.msra.mxu0 %v269
    %329 = vmatpush.bf16.msra.mxu0 %v267
    %330 = vmatpush.bf16.msra.mxu0 %v265
    %331 = vmatpush.bf16.msra.mxu0 %v263
    %332 = vmatpush.bf16.msra.mxu0 %v261
    %333 = vmatmul.bf16.gmra.mxu0 %v157
    %v334 = vpop.f32.mrf.mxu0
    %v335 = vadd.f32 %v141, %v334
    %v336 = vpop.f32.mrf.mxu0
    %v337 = vadd.f32 %v141, %v336
    %338 = vmatmul.bf16.gmra.mxu0 %v159
    %v339 = vpop.f32.mrf.mxu0
    %v340 = vadd.f32 %v141, %v339
    %v341 = vpop.f32.mrf.mxu0
    %v342 = vadd.f32 %v141, %v341
    %343 = vdwg.mxu0
    %344 = vmatpush.bf16.msra.mxu0 %v291
    %345 = vmatpush.bf16.msra.mxu0 %v289
    %346 = vmatpush.bf16.msra.mxu0 %v287
    %347 = vmatpush.bf16.msra.mxu0 %v285
    %348 = vmatpush.bf16.msra.mxu0 %v283
    %349 = vmatpush.bf16.msra.mxu0 %v281
    %350 = vmatpush.bf16.msra.mxu0 %v279
    %351 = vmatpush.bf16.msra.mxu0 %v277
    %352 = vmatmul.bf16.gmra.mxu0 %v158
    %v353 = vpop.f32.mrf.mxu0
    %v354 = vadd.f32 %v335, %v353
    %v355 = vpop.f32.mrf.mxu0
    %v356 = vadd.f32 %v337, %v355
    %357 = vmatmul.bf16.gmra.mxu0 %v160
    %v358 = vpop.f32.mrf.mxu0
    %v359 = vadd.f32 %v340, %v358
    %v360 = vpop.f32.mrf.mxu0
    %v361 = vadd.f32 %v342, %v360
    %362 = vdwg.mxu0
    %363 = vmatpush.bf16.msra.mxu0 %v276
    %364 = vmatpush.bf16.msra.mxu0 %v274
    %365 = vmatpush.bf16.msra.mxu0 %v272
    %366 = vmatpush.bf16.msra.mxu0 %v270
    %367 = vmatpush.bf16.msra.mxu0 %v268
    %368 = vmatpush.bf16.msra.mxu0 %v266
    %369 = vmatpush.bf16.msra.mxu0 %v264
    %370 = vmatpush.bf16.msra.mxu0 %v262
    %371 = vmatmul.bf16.gmra.mxu0 %v157
    %v372 = vpop.f32.mrf.mxu0
    %v373 = vadd.f32 %v142, %v372
    %v374 = vpop.f32.mrf.mxu0
    %v375 = vadd.f32 %v142, %v374
    %376 = vmatmul.bf16.gmra.mxu0 %v159
    %v377 = vpop.f32.mrf.mxu0
    %v378 = vadd.f32 %v142, %v377
    %v379 = vpop.f32.mrf.mxu0
    %v380 = vadd.f32 %v142, %v379
    %381 = vdwg.mxu0
    %382 = vmatpush.bf16.msra.mxu0 %v292
    %383 = vmatpush.bf16.msra.mxu0 %v290
    %384 = vmatpush.bf16.msra.mxu0 %v288
    %385 = vmatpush.bf16.msra.mxu0 %v286
    %386 = vmatpush.bf16.msra.mxu0 %v284
    %387 = vmatpush.bf16.msra.mxu0 %v282
    %388 = vmatpush.bf16.msra.mxu0 %v280
    %389 = vmatpush.bf16.msra.mxu0 %v278
    %390 = vmatmul.bf16.gmra.mxu0 %v158
    %v391 = vpop.f32.mrf.mxu0
    %v392 = vadd.f32 %v373, %v391
    %v393 = vpop.f32.mrf.mxu0
    %v394 = vadd.f32 %v375, %v393
    %395 = vmatmul.bf16.gmra.mxu0 %v160
    %v396 = vpop.f32.mrf.mxu0
    %v397 = vadd.f32 %v378, %v396
    %v398 = vpop.f32.mrf.mxu0
    %v399 = vadd.f32 %v380, %v398
    %400 = vdwg.mxu0
    %v401 = vmax.f32 %v354, 0.0
    %v402 = vmax.f32 %v392, 0.0
    %v403 = vmax.f32 %v356, 0.0
    %v404 = vmax.f32 %v394, 0.0
    %v405 = vmax.f32 %v359, 0.0
    %v406 = vmax.f32 %v397, 0.0
    %v407 = vmax.f32 %v361, 0.0
    %v408 = vmax.f32 %v399, 0.0
    %v409 = vpack.c.bf16 %v403, %v401
    %v410 = vpack.c.bf16 %v404, %v402
    %v411 = vpack.c.bf16 %v407, %v405
    %v412 = vpack.c.bf16 %v408, %v406
    %v413 = vld [vmem:[#allocation8] sm:$0xf]
    %v414 = vld [vmem:[#allocation8 + $0x4] sm:$0xf]
    %v415 = vld [vmem:[#allocation8 + $0x8] sm:$0xf]
    %v416 = vld [vmem:[#allocation8 + $0xc] sm:$0xf]
    %v417 = vld [vmem:[#allocation8 + $0x10] sm:$0xf]
    %v418 = vld [vmem:[#allocation8 + $0x14] sm:$0xf]
    %v419 = vld [vmem:[#allocation8 + $0x18] sm:$0xf]
    %v420 = vld [vmem:[#allocation8 + $0x1c] sm:$0xf]
    %v421 = vld [vmem:[#allocation8 + $0x20] sm:$0xf]
    %v422 = vld [vmem:[#allocation8 + $0x24] sm:$0xf]
    %v423 = vld [vmem:[#allocation8 + $0x28] sm:$0xf]
    %v424 = vld [vmem:[#allocation8 + $0x2c] sm:$0xf]
    %v425 = vld [vmem:[#allocation8 + $0x30] sm:$0xf]
    %v426 = vld [vmem:[#allocation8 + $0x34] sm:$0xf]
    %v427 = vld [vmem:[#allocation8 + $0x38] sm:$0xf]
    %v428 = vld [vmem:[#allocation8 + $0x3c] sm:$0xf]
    %v429 = vld [vmem:[#allocation8 + $0x40] sm:$0xf]
    %v430 = vld [vmem:[#allocation8 + $0x44] sm:$0xf]
    %v431 = vld [vmem:[#allocation8 + $0x48] sm:$0xf]
    %v432 = vld [vmem:[#allocation8 + $0x4c] sm:$0xf]
    %v433 = vld [vmem:[#allocation8 + $0x50] sm:$0xf]
    %v434 = vld [vmem:[#allocation8 + $0x54] sm:$0xf]
    %v435 = vld [vmem:[#allocation8 + $0x58] sm:$0xf]
    %v436 = vld [vmem:[#allocation8 + $0x5c] sm:$0xf]
    %v437 = vld [vmem:[#allocation8 + $0x60] sm:$0xf]
    %v438 = vld [vmem:[#allocation8 + $0x64] sm:$0xf]
    %v439 = vld [vmem:[#allocation8 + $0x68] sm:$0xf]
    %v440 = vld [vmem:[#allocation8 + $0x6c] sm:$0xf]
    %v441 = vld [vmem:[#allocation8 + $0x70] sm:$0xf]
    %v442 = vld [vmem:[#allocation8 + $0x74] sm:$0xf]
    %v443 = vld [vmem:[#allocation8 + $0x78] sm:$0xf]
    %v444 = vld [vmem:[#allocation8 + $0x7c] sm:$0xf]
    %v445 = vld [vmem:[%s4] sm:$0x1]
    %v447 = vperm.slane %v445, 0
    %v481 = vunpack.c.l.b16 %v413
    %v482 = vunpack.c.l.b16 %v414
    %v483 = vunpack.c.l.b16 %v415
    %v484 = vunpack.c.l.b16 %v416
    %v485 = vunpack.c.l.b16 %v417
    %v486 = vunpack.c.l.b16 %v418
    %v487 = vunpack.c.l.b16 %v419
    %v488 = vunpack.c.l.b16 %v420
    %v489 = vunpack.c.l.b16 %v421
    %v490 = vunpack.c.l.b16 %v422
    %v491 = vunpack.c.l.b16 %v423
    %v492 = vunpack.c.l.b16 %v424
    %v493 = vunpack.c.l.b16 %v425
    %v494 = vunpack.c.l.b16 %v426
    %v495 = vunpack.c.l.b16 %v427
    %v496 = vunpack.c.l.b16 %v428
    %v497 = vunpack.c.l.b16 %v429
    %v498 = vunpack.c.l.b16 %v430
    %v499 = vunpack.c.l.b16 %v431
    %v500 = vunpack.c.l.b16 %v432
    %v501 = vunpack.c.l.b16 %v433
    %v502 = vunpack.c.l.b16 %v434
    %v503 = vunpack.c.l.b16 %v435
    %v504 = vunpack.c.l.b16 %v436
    %v505 = vunpack.c.l.b16 %v437
    %v506 = vunpack.c.l.b16 %v438
    %v507 = vunpack.c.l.b16 %v439
    %v508 = vunpack.c.l.b16 %v440
    %v509 = vunpack.c.l.b16 %v441
    %v510 = vunpack.c.l.b16 %v442
    %v511 = vunpack.c.l.b16 %v443
    %v512 = vunpack.c.l.b16 %v444
    %v513 = vpack.c.b16 %v482, %v481
    %v514 = vpack.c.b16 %v484, %v483
    %v515 = vpack.c.b16 %v486, %v485
    %v516 = vpack.c.b16 %v488, %v487
    %v517 = vpack.c.b16 %v490, %v489
    %v518 = vpack.c.b16 %v492, %v491
    %v519 = vpack.c.b16 %v494, %v493
    %v520 = vpack.c.b16 %v496, %v495
    %v521 = vpack.c.b16 %v498, %v497
    %v522 = vpack.c.b16 %v500, %v499
    %v523 = vpack.c.b16 %v502, %v501
    %v524 = vpack.c.b16 %v504, %v503
    %v525 = vpack.c.b16 %v506, %v505
    %v526 = vpack.c.b16 %v508, %v507
    %v527 = vpack.c.b16 %v510, %v509
    %v528 = vpack.c.b16 %v512, %v511
    %545 = vmatpush.bf16.msra.mxu0 %v520
    %546 = vmatpush.bf16.msra.mxu0 %v519
    %547 = vmatpush.bf16.msra.mxu0 %v518
    %548 = vmatpush.bf16.msra.mxu0 %v517
    %549 = vmatpush.bf16.msra.mxu0 %v516
    %550 = vmatpush.bf16.msra.mxu0 %v515
    %551 = vmatpush.bf16.msra.mxu0 %v514
    %552 = vmatpush.bf16.msra.mxu0 %v513
    %553 = vmatmul.bf16.gmra.mxu0 %v409
    %v554 = vpop.f32.mrf.mxu0
    %v555 = vadd.f32 %v447, %v554
    %v556 = vpop.f32.mrf.mxu0
    %v557 = vadd.f32 %v447, %v556
    %558 = vmatmul.bf16.gmra.mxu0 %v411
    %v559 = vpop.f32.mrf.mxu0
    %v560 = vadd.f32 %v447, %v559
    %v561 = vpop.f32.mrf.mxu0
    %v562 = vadd.f32 %v447, %v561
    %563 = vdwg.mxu0
    %564 = vmatpush.bf16.msra.mxu0 %v528
    %565 = vmatpush.bf16.msra.mxu0 %v527
    %566 = vmatpush.bf16.msra.mxu0 %v526
    %567 = vmatpush.bf16.msra.mxu0 %v525
    %568 = vmatpush.bf16.msra.mxu0 %v524
    %569 = vmatpush.bf16.msra.mxu0 %v523
    %570 = vmatpush.bf16.msra.mxu0 %v522
    %571 = vmatpush.bf16.msra.mxu0 %v521
    %572 = vmatmul.bf16.gmra.mxu0 %v410
    %v573 = vpop.f32.mrf.mxu0
    %v574 = vadd.f32 %v555, %v573
    %v575 = vpop.f32.mrf.mxu0
    %v576 = vadd.f32 %v557, %v575
    %577 = vmatmul.bf16.gmra.mxu0 %v412
    %v578 = vpop.f32.mrf.mxu0
    %v579 = vadd.f32 %v560, %v578
    %v580 = vpop.f32.mrf.mxu0
    %v581 = vadd.f32 %v562, %v580
    %582 = vdwg.mxu0
    %v583 = vmax.f32 %v574, 0.0
    %v584 = vmax.f32 %v576, 0.0
    %v585 = vmax.f32 %v579, 0.0
    %v586 = vmax.f32 %v581, 0.0
    %v587 = vpack.c.bf16 %v584, %v583
    %v588 = vpack.c.bf16 %v586, %v585
    %v589 = vld [vmem:[#allocation10] sm:$0xf]
    %v590 = vld [vmem:[#allocation10 + $0x4] sm:$0xf]
    %v591 = vld [vmem:[#allocation10 + $0x8] sm:$0xf]
    %v592 = vld [vmem:[#allocation10 + $0xc] sm:$0xf]
    %v593 = vld [vmem:[#allocation10 + $0x10] sm:$0xf]
    %v594 = vld [vmem:[#allocation10 + $0x14] sm:$0xf]
    %v595 = vld [vmem:[#allocation10 + $0x18] sm:$0xf]
    %v596 = vld [vmem:[#allocation10 + $0x1c] sm:$0xf]
    %v597 = vld [vmem:[#allocation10 + $0x20] sm:$0xf]
    %v598 = vld [vmem:[#allocation10 + $0x24] sm:$0xf]
    %v599 = vld [vmem:[#allocation10 + $0x28] sm:$0xf]
    %v600 = vld [vmem:[#allocation10 + $0x2c] sm:$0xf]
    %v601 = vld [vmem:[#allocation10 + $0x30] sm:$0xf]
    %v602 = vld [vmem:[#allocation10 + $0x34] sm:$0xf]
    %v603 = vld [vmem:[#allocation10 + $0x38] sm:$0xf]
    %v604 = vld [vmem:[#allocation10 + $0x3c] sm:$0xf]
    %v605 = vld [vmem:[%s6] sm:$0x1]
    %v607 = vperm.slane %v605, 0
    %v625 = vunpack.c.l.b16 %v589
    %v626 = vunpack.c.l.b16 %v590
    %v627 = vunpack.c.l.b16 %v591
    %v628 = vunpack.c.l.b16 %v592
    %v629 = vunpack.c.l.b16 %v593
    %v630 = vunpack.c.l.b16 %v594
    %v631 = vunpack.c.l.b16 %v595
    %v632 = vunpack.c.l.b16 %v596
    %v633 = vunpack.c.l.b16 %v597
    %v634 = vunpack.c.l.b16 %v598
    %v635 = vunpack.c.l.b16 %v599
    %v636 = vunpack.c.l.b16 %v600
    %v637 = vunpack.c.l.b16 %v601
    %v638 = vunpack.c.l.b16 %v602
    %v639 = vunpack.c.l.b16 %v603
    %v640 = vunpack.c.l.b16 %v604
    %v641 = vpack.c.b16 %v626, %v625
    %v642 = vpack.c.b16 %v628, %v627
    %v643 = vpack.c.b16 %v630, %v629
    %v644 = vpack.c.b16 %v632, %v631
    %v645 = vpack.c.b16 %v634, %v633
    %v646 = vpack.c.b16 %v636, %v635
    %v647 = vpack.c.b16 %v638, %v637
    %v648 = vpack.c.b16 %v640, %v639
    %657 = vmatpush.bf16.msra.mxu0 %v648
    %658 = vmatpush.bf16.msra.mxu0 %v647
    %659 = vmatpush.bf16.msra.mxu0 %v646
    %660 = vmatpush.bf16.msra.mxu0 %v645
    %661 = vmatpush.bf16.msra.mxu0 %v644
    %662 = vmatpush.bf16.msra.mxu0 %v643
    %663 = vmatpush.bf16.msra.mxu0 %v642
    %664 = vmatpush.bf16.msra.mxu0 %v641
    %665 = vmatmul.bf16.gmra.mxu0 %v587
    %v666 = vpop.f32.mrf.mxu0
    %v667 = vadd.f32 %v607, %v666
    %v668 = vpop.f32.mrf.mxu0
    %v669 = vadd.f32 %v607, %v668
    %670 = vmatmul.bf16.gmra.mxu0 %v588
    %v671 = vpop.f32.mrf.mxu0
    %v672 = vadd.f32 %v607, %v671
    %v673 = vpop.f32.mrf.mxu0
    %v674 = vadd.f32 %v607, %v673
    %675 = vdwg.mxu0
    %v676 = vmax.f32 %v667, 0.0
    %v677 = vmax.f32 %v669, 0.0
    %v678 = vmax.f32 %v672, 0.0
    %v679 = vmax.f32 %v674, 0.0
    %680 = vst [vmem:[#allocation11] sm:$0xff] %v676
    %681 = vst [vmem:[#allocation11 + $0x8] sm:$0xff] %v677
    %682 = vst [vmem:[#allocation11 + $0x10] sm:$0xff] %v678
    %683 = vst [vmem:[#allocation11 + $0x18] sm:$0xff] %v679
    // Predicated region
    $region50: #{tpu_custom_call.1} parent=1 // pred_check
      _
    $region51: #{tpu_custom_call.1} parent=1 // pred_check_branch
      %685 = sbr.rel (0) target = $region53
    $region52: #{tpu_custom_call.1} parent=1 // pred_region
      %687 = vsyncadd [#allocation4], 0
      %s688 = sshll.u32 [#allocation11], 4
      %s689 = int_to_ptr.vmem [resolvable:$true] %s688
      %s690 = sshll.u32 %s7, 4
      %s691 = int_to_ptr.hbm [resolvable:$true] %s690
      %696 = dma.vmem_to_hbm [thread:$0]  %s689, 512, %s691, [#allocation4], 128, 128, 8
    $region53: #{tpu_custom_call.1} parent=1 // pred_fallthru
      _
    // Predicated region
    $region54: #{tpu_custom_call.1} parent=1 // pred_check
      _
    $region55: #{tpu_custom_call.1} parent=1 // pred_check_branch
      %698 = sbr.rel (0) target = $region57
    $region56: #{tpu_custom_call.1} parent=1 // pred_region
      %700 = dma.done [#allocation4], 512
    $region57: #{tpu_custom_call.1} parent=1 // pred_fallthru
      _
    %701 = vsyncpa [#allocation3], 1
    %702 = vsyncpa [#allocation6], 1
    %703 = vsyncpa [#allocation9], 1
    %704 = vsyncpa [#allocation4], 1

</llo_original>
